<compile_context>
chip_gen: v7x
topology: tpu7x:2x2x1
jax: 0.10.0
libtpu: 0.0.40
codegen_flags: <defaults>
</compile_context>

<pallas_src>
import jax
import jax.numpy as jnp
from jax.experimental import pallas as pl
from jax.experimental.pallas import tpu as pltpu

_LANES = 512                          # lane-dense slab width (multiple of 128)
_TARGET_TILE_BYTES = 2 * 1024 * 1024  # ~2 MiB f32 input tile per grid step


def _quadratic_kernel(w_ref, b_ref, x_ref, o_ref):
    # w_ref, b_ref: (1, 1) scalars in SMEM
    # x_ref, o_ref: (tile_rows, _LANES) tiles in VMEM
    w = w_ref[0, 0]
    b = b_ref[0, 0]
    x = x_ref[...]
    o_ref[...] = w * (x * x) + b


def quadratic_model_forward(x: jax.Array, weights: jax.Array,
                            bias: jax.Array) -> jax.Array:
    """Pallas equivalent of QuadradicModel.forward for arbitrary-shaped x."""
    orig_shape = x.shape
    orig_dtype = x.dtype

    x_f32 = x.astype(jnp.float32)
    flat = x_f32.reshape(-1)
    total = flat.shape[0]

    lanes = _LANES
    rows = pl.cdiv(total, lanes)                       # logical rows needed

    # Largest tile (in rows) that keeps one f32 tile near the 2 MiB target.
    max_tile_rows = max(8, (_TARGET_TILE_BYTES // (lanes * 4)) // 8 * 8)

    if rows <= max_tile_rows:
        # Tiny/medium input: one block covering the whole (row-padded) array.
        tile_rows = ((rows + 7) // 8) * 8              # sublane multiple of 8
    else:
        tile_rows = max_tile_rows                      # already multiple of 8

    padded_rows = ((rows + tile_rows - 1) // tile_rows) * tile_rows
    padded_total = padded_rows * lanes
    if padded_total != total:
        flat = jnp.pad(flat, (0, padded_total - total))
    x2d = flat.reshape(padded_rows, lanes)

    grid = (padded_rows // tile_rows,)

    # Scalars reshaped to (1, 1) for SMEM placement.
    w2 = weights.reshape(1, 1).astype(jnp.float32)
    b2 = bias.reshape(1, 1).astype(jnp.float32)

    out2d = pl.pallas_call(
        _quadratic_kernel,
        out_shape=jax.ShapeDtypeStruct((padded_rows, lanes), jnp.float32),
        grid=grid,
        in_specs=[
            pl.BlockSpec(memory_space=pltpu.SMEM),     # weights scalar
            pl.BlockSpec(memory_space=pltpu.SMEM),     # bias scalar
            pl.BlockSpec((tile_rows, lanes), lambda i: (i, 0)),
        ],
        out_specs=pl.BlockSpec((tile_rows, lanes), lambda i: (i, 0)),
        compiler_params=pltpu.CompilerParams(
            dimension_semantics=("parallel",),
            vmem_limit_bytes=32 * 1024 * 1024,
        ),
    )(w2, b2, x2d)

    out = out2d.reshape(-1)[:total].reshape(orig_shape)
    return out.astype(orig_dtype)


if __name__ == "__main__":
    key = jax.random.PRNGKey(0)
    kx, kw, kb, kr = jax.random.split(key, 4)

    # Deterministic "parameter init" standing in for torch.randn(1) params.
    weights = jax.random.normal(kw, (1,), dtype=jnp.float32)
    bias = jax.random.normal(kb, (1,), dtype=jnp.float32)

    # Small input consistent with an elementwise model: [32, 128] float32.
    x = jax.random.normal(kx, (32, 128), dtype=jnp.float32)

    out = quadratic_model_forward(x, weights, bias)
    out = jax.block_until_ready(out)

    # Reference check in plain JAX (same semantics as the PyTorch forward).
    ref = weights[0] * (x * x) + bias[0]
    assert out.shape == x.shape and out.dtype == x.dtype
    assert jnp.allclose(out, ref, atol=1e-6, rtol=1e-6)

    # Robustness check: ragged shape (exercises the flatten + pad path).
    x2 = jax.random.normal(kr, (7, 33), dtype=jnp.float32)
    out2 = jax.block_until_ready(quadratic_model_forward(x2, weights, bias))
    ref2 = weights[0] * (x2 * x2) + bias[0]
    assert out2.shape == x2.shape and out2.dtype == x2.dtype
    assert jnp.allclose(out2, ref2, atol=1e-6, rtol=1e-6)

    print("KERNEL_OK")
</pallas_src>

<mosaic_0001>
module attributes {stable_mosaic.version = 11 : i64} {
  func.func @_quadratic_kernel(%arg0: i32, %arg1: memref<1x1xf32, #tpu.memory_space<smem>>, %arg2: memref<1x1xf32, #tpu.memory_space<smem>>, %arg3: memref<8x512xf32, #tpu.memory_space<vmem>>, %arg4: memref<8x512xf32, #tpu.memory_space<vmem>>) attributes {dimension_semantics = [#tpu.dimension_semantics<parallel>], iteration_bounds = array<i64: 1>, scalar_prefetch = 0 : i64, scratch_operands = 0 : i64, tpu.core_type = #tpu.core_type<tc>, window_params = [{transform_indices = @transform_0, window_bounds = array<i64: 1, 1>}, {transform_indices = @transform_1, window_bounds = array<i64: 1, 1>}, {transform_indices = @transform_2, window_bounds = array<i64: 8, 512>}, {transform_indices = @transform_3, window_bounds = array<i64: 8, 512>}]} {
    %c0 = arith.constant 0 : index
    %c0_0 = arith.constant 0 : index
    %0 = memref.load %arg1[%c0, %c0_0] : memref<1x1xf32, #tpu.memory_space<smem>>
    %c0_1 = arith.constant 0 : index
    %c0_2 = arith.constant 0 : index
    %1 = memref.load %arg2[%c0_1, %c0_2] : memref<1x1xf32, #tpu.memory_space<smem>>
    %c0_3 = arith.constant 0 : index
    %c0_4 = arith.constant 0 : index
    %2 = vector.load %arg3[%c0_3, %c0_4] : memref<8x512xf32, #tpu.memory_space<vmem>>, vector<8x512xf32>
    %3 = arith.mulf %2, %2 : vector<8x512xf32>
    %4 = vector.broadcast %0 : f32 to vector<8x512xf32>
    %5 = arith.mulf %4, %3 : vector<8x512xf32>
    %6 = vector.broadcast %1 : f32 to vector<8x512xf32>
    %7 = arith.addf %5, %6 : vector<8x512xf32>
    %c0_5 = arith.constant 0 : index
    %c0_6 = arith.constant 0 : index
    %8 = vector.load %arg4[%c0_5, %c0_6] : memref<8x512xf32, #tpu.memory_space<vmem>>, vector<8x512xf32>
    tpu.vector_store %arg4[%c0_5, %c0_6], %7 {strides = array<i32>} : memref<8x512xf32, #tpu.memory_space<vmem>>, vector<8x512xf32>,
    return
  }
  func.func @transform_0(%arg0: i32) -> (i32, i32) {
    %c0_i32 = arith.constant 0 : i32
    %c0_i32_0 = arith.constant 0 : i32
    %c0_i32_1 = arith.constant 0 : i32
    return %c0_i32, %c0_i32_0 : i32, i32
  }
  func.func @transform_1(%arg0: i32) -> (i32, i32) {
    %c0_i32 = arith.constant 0 : i32
    %c0_i32_0 = arith.constant 0 : i32
    %c0_i32_1 = arith.constant 0 : i32
    return %c0_i32, %c0_i32_0 : i32, i32
  }
  func.func @transform_2(%arg0: i32) -> (i32, i32) {
    %c0_i32 = arith.constant 0 : i32
    %c0_i32_0 = arith.constant 0 : i32
    return %arg0, %c0_i32 : i32, i32
  }
  func.func @transform_3(%arg0: i32) -> (i32, i32) {
    %c0_i32 = arith.constant 0 : i32
    %c0_i32_0 = arith.constant 0 : i32
    return %arg0, %c0_i32 : i32, i32
  }
}

</mosaic_0001>

<llo_original>
// kernel: tpu_custom_call.1
$region0: #{tpu_custom_call.1}
  #allocation0 [shape = 'u32[]', space=smem, size = 0x4, offset = 0x4, fixed_abs, tag = 'smem constant byte address 0x4 - core index']
  #allocation1 [shape = 'u32[144,128]{1,0:T(1,128)}', space=vmem, size = 0x12000, scoped, tag = 'internal scratch']
  #allocation2 [shape = 'f32[1,1]{1,0:T(1,128)S(6)}', space=smem, size = 0x200, scoped, tag = 'scoped memory for tpu_custom_call.1']
  #allocation3 [shape = 'f32[1,1]{1,0:T(1,128)S(6)}', space=smem, size = 0x200, scoped, tag = 'scoped memory for tpu_custom_call.1']
  %s0 = inlined_call_operand.<no memory space> [shape: f32[1,1], index: 0, kind: input, shape index: {}]
  %s1 = inlined_call_operand.<no memory space> [shape: f32[1,1], index: 1, kind: input, shape index: {}]
  %s2 = inlined_call_operand.hbm [shape: f32[8,512], index: 2, kind: input, shape index: {}]
  %s3 = inlined_call_operand.hbm [shape: f32[8,512], index: 3, kind: output, shape index: {}]
  %s4 = sld [smem:[#allocation0]]
  $region26: #{tpu_custom_call.1} parent=0
    _
  %s6 = ssub.s32 1, %s4
  %s7 = scalar_select 0, %s6, %s4
  %8 = sst [smem:[#allocation2]] %s0
  %9 = sst [smem:[#allocation3]] %s1
  $region1: #{tpu_custom_call.1} parent=0
    #allocation4 [shape = 'u8[16384]{0}', space=vmem, size = 0x4000, scoped, tag = 'input window, operand 2, single buffered']
    #allocation5 [shape = 's32[1]{0}', space=sflag, size = 0x4, scoped, tag = 'scoped memory for tpu_custom_call.1']
    #allocation6 [shape = 's32[1]{0}', space=sflag, size = 0x4, scoped, tag = 'scoped memory for tpu_custom_call.1']
    #allocation7 [shape = 'u8[16384]{0}', space=vmem, size = 0x4000, scoped, tag = 'output window, operand 0, single buffered']
    %10 = vsyncpa [#allocation5], 0
    %11 = vsyncpa [#allocation6], 0
    // Predicated region
    $region2: #{tpu_custom_call.1} parent=1 // pred_check
      _
    $region3: #{tpu_custom_call.1} parent=1 // pred_check_branch
      %13 = sbr.rel (0) target = $region5
    $region4: #{tpu_custom_call.1} parent=1 // pred_region
      _
    $region5: #{tpu_custom_call.1} parent=1 // pred_fallthru
      _
    // Predicated region
    $region6: #{tpu_custom_call.1} parent=1 // pred_check
      _
    $region7: #{tpu_custom_call.1} parent=1 // pred_check_branch
      %15 = sbr.rel (0) target = $region9
    $region8: #{tpu_custom_call.1} parent=1 // pred_region
      _
    $region9: #{tpu_custom_call.1} parent=1 // pred_fallthru
      _
    // Predicated region
    $region10: #{tpu_custom_call.1} parent=1 // pred_check
      _
    $region11: #{tpu_custom_call.1} parent=1 // pred_check_branch
      %17 = sbr.rel (0) target = $region13
    $region12: #{tpu_custom_call.1} parent=1 // pred_region
      %s19 = ssub.s32 512, 512
      %20 = vsyncadd [#allocation5], %s19
      %s22 = sshll.u32 [#allocation4], 4
      %s23 = int_to_ptr.vmem [resolvable:$true] %s22
      %25 = dma.hbm_to_vmem [thread:$0]  %s2, 512, %s23, [#allocation5]
    $region13: #{tpu_custom_call.1} parent=1 // pred_fallthru
      _
    // Predicated region
    $region14: #{tpu_custom_call.1} parent=1 // pred_check
      _
    $region15: #{tpu_custom_call.1} parent=1 // pred_check_branch
      %27 = sbr.rel (0) target = $region17
    $region16: #{tpu_custom_call.1} parent=1 // pred_region
      %28 = dma.done [#allocation5], 512
    $region17: #{tpu_custom_call.1} parent=1 // pred_fallthru
      _
    %s29 = sld [smem:[#allocation2]]
    %s30 = sld [smem:[#allocation3]]
    %v31 = vld [vmem:[#allocation4] sm:$0xff]
    %v32 = vld [vmem:[#allocation4 + $0x8] sm:$0xff]
    %v33 = vld [vmem:[#allocation4 + $0x10] sm:$0xff]
    %v34 = vld [vmem:[#allocation4 + $0x18] sm:$0xff]
    %v35 = vmul.f32 %v31, %v31
    %v36 = vmul.f32 %v32, %v32
    %v37 = vmul.f32 %v33, %v33
    %v38 = vmul.f32 %v34, %v34
    %v39 = vstv %s29
    %v40 = vmul.f32 %v39, %v35
    %v41 = vmul.f32 %v39, %v36
    %v42 = vmul.f32 %v39, %v37
    %v43 = vmul.f32 %v39, %v38
    %v44 = vstv %s30
    %v45 = vadd.f32 %v40, %v44
    %v46 = vadd.f32 %v41, %v44
    %v47 = vadd.f32 %v42, %v44
    %v48 = vadd.f32 %v43, %v44
    %49 = vst [vmem:[#allocation7] sm:$0xff] %v45
    %50 = vst [vmem:[#allocation7 + $0x8] sm:$0xff] %v46
    %51 = vst [vmem:[#allocation7 + $0x10] sm:$0xff] %v47
    %52 = vst [vmem:[#allocation7 + $0x18] sm:$0xff] %v48
    // Predicated region
    $region18: #{tpu_custom_call.1} parent=1 // pred_check
      _
    $region19: #{tpu_custom_call.1} parent=1 // pred_check_branch
      %54 = sbr.rel (0) target = $region21
    $region20: #{tpu_custom_call.1} parent=1 // pred_region
      %s56 = ssub.s32 512, 512
      %57 = vsyncadd [#allocation6], %s56
      %s59 = sshll.u32 [#allocation7], 4
      %s60 = int_to_ptr.vmem [resolvable:$true] %s59
      %62 = dma.vmem_to_hbm [thread:$0]  %s60, 512, %s3, [#allocation6]
    $region21: #{tpu_custom_call.1} parent=1 // pred_fallthru
      _
    // Predicated region
    $region22: #{tpu_custom_call.1} parent=1 // pred_check
      _
    $region23: #{tpu_custom_call.1} parent=1 // pred_check_branch
      %64 = sbr.rel (0) target = $region25
    $region24: #{tpu_custom_call.1} parent=1 // pred_region
      %65 = dma.done [#allocation6], 512
    $region25: #{tpu_custom_call.1} parent=1 // pred_fallthru
      _
    %66 = vsyncpa [#allocation5], 1
    %67 = vsyncpa [#allocation6], 1

</llo_original>
